<compile_context>
chip_gen: v7x
topology: tpu7x:2x2x1
jax: 0.10.0
libtpu: 0.0.40
codegen_flags: <defaults>
</compile_context>

<pallas_src>
import jax
import jax.numpy as jnp
from jax.experimental import pallas as pl
from jax.experimental.pallas import tpu as pltpu

_VMEM_LIMIT = 32 * 1024 * 1024   # safe on v7x (64 MiB physical), plenty of headroom


def _round_up(x, m):
    return (x + m - 1) // m * m


# ------------------------------ tiling choices --------------------------------

def _attn_tiles(N):
    """dst/src tile sizes for the attention kernel."""
    if N <= 128:
        n_pad = _round_up(N, 8)
        # Split the dst axis in two only when every block stays aligned to the
        # int8 (32) / bf16 (16) native sublane tiling -> both v7x TCs get work.
        t_dst = n_pad // 2 if n_pad % 64 == 0 else n_pad
        t_src = n_pad
    else:
        n_pad = _round_up(N, 256)
        t_dst = 128          # >= 2 dst tiles -> megacore 'parallel' axis is useful
        t_src = 256
    return n_pad, t_dst, t_src


def _proj_tiles(n_pad, hd):
    t_rows = n_pad if n_pad <= 256 else 256
    t_hd = 256 if (hd > 256 and hd % 256 == 0) else hd
    return t_rows, t_hd


# ----------------------------- projection kernel -----------------------------

def _proj_kernel(h_ref, w_ref, z_ref, zt_ref):
    # h_ref: (t_rows, Din) bf16, w_ref: (Din, t_hd) bf16
    # z_ref: (t_rows, t_hd) bf16, zt_ref: (t_hd, t_rows) bf16
    z = jnp.dot(h_ref[...], w_ref[...], preferred_element_type=jnp.float32)
    z_ref[...] = z.astype(z_ref.dtype)
    # transposed copy written in-kernel: no wrapper-side HBM transpose pass.
    zt_ref[...] = z.T.astype(zt_ref.dtype)


def _project(h_bf, w_bf, n_pad, hd, t_rows, t_hd):
    # TODO(synk): add a K (Din) grid axis + f32 accumulator for very large Din.
    din = h_bf.shape[1]
    return pl.pallas_call(
        _proj_kernel,
        out_shape=(jax.ShapeDtypeStruct((n_pad, hd), jnp.bfloat16),
                   jax.ShapeDtypeStruct((hd, n_pad), jnp.bfloat16)),
        grid=(n_pad // t_rows, hd // t_hd),
        in_specs=[
            pl.BlockSpec((t_rows, din), lambda i, j: (i, 0)),
            pl.BlockSpec((din, t_hd), lambda i, j: (0, j)),
        ],
        out_specs=(
            pl.BlockSpec((t_rows, t_hd), lambda i, j: (i, j)),
            pl.BlockSpec((t_hd, t_rows), lambda i, j: (j, i)),
        ),
        compiler_params=pltpu.CompilerParams(
            dimension_semantics=("parallel", "parallel"),
            vmem_limit_bytes=_VMEM_LIMIT,
        ),
    )(h_bf, w_bf)


# --------------------------- attention + aggregation -------------------------

def _make_attn_kernel(H, Dout, t_dst, n_src):
    HD = H * Dout
    NEG = -1.0e30          # Python float -> jaxpr literal (no captured array const)

    def kernel(nnz_ref, zd_ref, zst_ref, lin_ref, lint_ref, adj_ref, aabs_ref,
               out_ref, m_sc, l_sc, acc_sc):
        # nnz_ref : (n_dst*n_src,) int32 in SMEM (scalar prefetch)
        # zd_ref  : (t_dst, HD) bf16        zst_ref : (HD, t_src) bf16
        # lin_ref : (t_dst, H) f32          lint_ref: (H, t_src) f32
        # adj_ref : (t_dst, t_src) int8     aabs_ref: (H, Dout) f32 in SMEM
        # out_ref : (t_dst, HD) f32
        # scratch : m_sc/l_sc (t_dst, H) f32, acc_sc (t_dst, HD) f32
        i = pl.program_id(0)
        j = pl.program_id(1)

        @pl.when(j == 0)
        def _init():
            m_sc[...] = jnp.full(m_sc.shape, -3.0e38, m_sc.dtype)
            l_sc[...] = jnp.zeros(l_sc.shape, l_sc.dtype)
            acc_sc[...] = jnp.zeros(acc_sc.shape, acc_sc.dtype)

        # Tile-level sparsity skip: empty (dst, src) tiles contribute nothing.
        @pl.when(nnz_ref[i * n_src + j] > 0)
        def _body():
            zd = zd_ref[...].astype(jnp.float32)        # (t_dst, HD)
            zst = zst_ref[...].astype(jnp.float32)      # (HD, t_src)
            lin_d = lin_ref[...]                        # (t_dst, H)
            lin_s = lint_ref[...]                       # (H, t_src)
            # single additive mask bias per tile (no per-head select)
            bias = jnp.where(adj_ref[...] > 0, 0.0, NEG)

            m_prev = m_sc[...]
            l_prev = l_sc[...]
            acc_prev = acc_sc[...]

            m_cols, l_cols, acc_cols = [], [], []
            for h in range(H):
                base = h * Dout
                # linear part of the GATv2 score was precomputed per node/head
                e = bias + lin_d[:, h:h + 1] + lin_s[h:h + 1, :]
                # |x| part: broadcast-add + abs + scalar FMA per feature.
                # TODO(synk): switch to lax.fori_loop(..., unroll=4) for large Dout.
                for d in range(Dout):
                    c = base + d
                    e = e + aabs_ref[h, d] * jnp.abs(zd[:, c:c + 1] + zst[c:c + 1, :])

                # online masked softmax across src tiles (flash style, per head)
                m_h = m_prev[:, h:h + 1]
                m_new = jnp.maximum(m_h, jnp.max(e, axis=1, keepdims=True))
                corr = jnp.exp(m_h - m_new)
                p = jnp.exp(e - m_new)                  # (t_dst, t_src) f32
                l_cols.append(corr * l_prev[:, h:h + 1]
                              + jnp.sum(p, axis=1, keepdims=True))
                agg = jax.lax.dot_general(              # p @ z_src_h  (bf16 MXU)
                    p.astype(jnp.bfloat16),
                    zst[base:base + Dout, :].astype(jnp.bfloat16),
                    (((1,), (1,)), ((), ())),
                    preferred_element_type=jnp.float32)  # (t_dst, Dout)
                acc_cols.append(corr * acc_prev[:, base:base + Dout] + agg)
                m_cols.append(m_new)

            # one full-width store per scratch buffer per step
            m_sc[...] = m_cols[0] if H == 1 else jnp.concatenate(m_cols, axis=1)
            l_sc[...] = l_cols[0] if H == 1 else jnp.concatenate(l_cols, axis=1)
            acc_sc[...] = acc_cols[0] if H == 1 else jnp.concatenate(acc_cols, axis=1)

        @pl.when(j == pl.num_programs(1) - 1)
        def _finalize():
            # deferred softmax normalization, written lane-dense once.
            inv_cols = []
            for h in range(H):
                inv = 1.0 / jnp.maximum(l_sc[:, h:h + 1], 1e-30)
                inv_cols.append(jnp.broadcast_to(inv, (t_dst, Dout)))
            inv_full = inv_cols[0] if H == 1 else jnp.concatenate(inv_cols, axis=1)
            out_ref[...] = (acc_sc[...] * inv_full).astype(out_ref.dtype)

    return kernel


def gatv2_conv(h, adj, W, attn, *, negative_slope=0.2):
    """One GATv2Conv layer (share_weights=True, bias=False, inference, no residual).

    h:    (N, Din) float32 node features
    adj:  (N, N)   adjacency, adj[dst, src] != 0 iff edge src -> dst
    W:    (Din, H*Dout) shared fc weight (transposed vs. torch)
    attn: (H, Dout)     per-head attention vector
    returns (N, H*Dout) head-concatenated output
    """
    N, Din = h.shape
    H, Dout = attn.shape
    HD = H * Dout
    assert W.shape == (Din, HD)

    N_pad, t_dst, t_src = _attn_tiles(N)
    n_dst = N_pad // t_dst
    n_src = N_pad // t_src

    h32 = h.astype(jnp.float32)
    adj_i8 = (adj != 0).astype(jnp.int8)
    if N_pad != N:
        h32 = jnp.pad(h32, ((0, N_pad - N), (0, 0)))
        adj_i8 = jnp.pad(adj_i8, ((0, N_pad - N), (0, N_pad - N)))

    # Projection for all heads at once; bf16 operands for the MXU, and z / z^T
    # stored in bf16 (z^T produced in-kernel -> no extra HBM transpose pass).
    t_rows, t_hd = _proj_tiles(N_pad, HD)
    z_bf, zT_bf = _project(h32.astype(jnp.bfloat16), W.astype(jnp.bfloat16),
                           N_pad, HD, t_rows, t_hd)

    # leaky_relu(x) = c1*x + c2*|x|  with c1=(1+s)/2, c2=(1-s)/2.
    # The c1-linear part of the score only needs a_h . z_i per node/head: tiny.
    s = float(negative_slope)
    c1 = 0.5 * (1.0 + s)
    c2 = 0.5 * (1.0 - s)
    attn_f = attn.astype(jnp.float32)
    lin = c1 * jnp.einsum(
        'nhd,hd->nh', z_bf.astype(jnp.float32).reshape(N_pad, H, Dout), attn_f)
    linT = lin.T                                   # (H, N_pad), tiny
    attn_abs = c2 * attn_f                         # (H, Dout) -> SMEM

    # Per-tile edge counts for sparsity skipping (scalar prefetch into SMEM).
    nnz = adj_i8.astype(jnp.int32).reshape(
        n_dst, t_dst, n_src, t_src).sum(axis=(1, 3)).reshape(-1)

    kernel = _make_attn_kernel(H, Dout, t_dst, n_src)

    out = pl.pallas_call(
        kernel,
        out_shape=jax.ShapeDtypeStruct((N_pad, HD), jnp.float32),
        grid_spec=pltpu.PrefetchScalarGridSpec(
            num_scalar_prefetch=1,
            grid=(n_dst, n_src),
            in_specs=[
                pl.BlockSpec((t_dst, HD), lambda i, j, nz: (i, 0)),      # z (dst rows, bf16)
                pl.BlockSpec((HD, t_src), lambda i, j, nz: (0, j)),      # z^T (src cols, bf16)
                pl.BlockSpec((t_dst, H), lambda i, j, nz: (i, 0)),       # c1 * a.z  (dst)
                pl.BlockSpec((H, t_src), lambda i, j, nz: (0, j)),       # c1 * a.z  (src, transposed)
                pl.BlockSpec((t_dst, t_src), lambda i, j, nz: (i, j)),   # adjacency tile (int8)
                pl.BlockSpec(memory_space=pltpu.MemorySpace.SMEM),       # c2-scaled attn vector
            ],
            out_specs=pl.BlockSpec((t_dst, HD), lambda i, j, nz: (i, 0)),
            scratch_shapes=[
                pltpu.VMEM((t_dst, H), jnp.float32),    # running max
                pltpu.VMEM((t_dst, H), jnp.float32),    # running denom
                pltpu.VMEM((t_dst, HD), jnp.float32),   # unnormalized accumulator
            ],
        ),
        compiler_params=pltpu.CompilerParams(
            dimension_semantics=("parallel", "arbitrary"),
            vmem_limit_bytes=_VMEM_LIMIT,
        ),
    )(nnz, z_bf, zT_bf, lin, linT, adj_i8, attn_abs)

    return out[:N]


# ----------------------------- full GATv2 model -------------------------------

def init_gatv2_params(key, num_layers, in_dim, num_hidden, num_classes, heads):
    """Deterministic params matching the torch layer stack (xavier-normal-ish init)."""
    gain = 2.0 ** 0.5  # nn.init.calculate_gain('relu')
    dims = [(in_dim, num_hidden, heads[0])]
    for l in range(1, num_layers):
        dims.append((num_hidden * heads[l - 1], num_hidden, heads[l]))
    dims.append((num_hidden * heads[-2], num_classes, heads[-1]))

    layers = []
    keys = jax.random.split(key, 2 * len(dims))
    for i, (din, dout, hh) in enumerate(dims):
        kw, ka = keys[2 * i], keys[2 * i + 1]
        std_w = gain * (2.0 / (din + hh * dout)) ** 0.5
        W = (std_w * jax.random.normal(kw, (hh * dout, din), jnp.float32)).T  # (din, H*Dout)
        std_a = gain * (2.0 / (hh * dout + dout)) ** 0.5
        A = std_a * jax.random.normal(ka, (hh, dout), jnp.float32)            # (H, Dout)
        layers.append((W, A))
    return {"layers": layers}


def gatv2_forward(params, adj, feats, *, negative_slope=0.2):
    """Matches GATv2.forward: hidden layers (ELU + head concat), last layer mean over heads."""
    h = feats
    layers = params["layers"]
    for (W, A) in layers[:-1]:
        h = gatv2_conv(h, adj, W, A, negative_slope=negative_slope)
        h = jax.nn.elu(h)                       # activation inside GATv2Conv; flatten == concat
    W, A = layers[-1]
    out = gatv2_conv(h, adj, W, A, negative_slope=negative_slope)  # (N, H_last*C)
    H_last, C = A.shape
    return out.reshape(feats.shape[0], H_last, C).mean(axis=1)     # .mean(1) over heads


# ------------------------------ pure-JAX reference ----------------------------

def _reference_gatv2_conv(h, adj, W, attn, negative_slope):
    N = h.shape[0]
    H, Dout = attn.shape
    z = (h @ W).reshape(N, H, Dout)
    x = z[:, None, :, :] + z[None, :, :, :]                 # [dst, src, H, D]
    e = jnp.einsum('ijhd,hd->ijh', jax.nn.leaky_relu(x, negative_slope), attn)
    mask = (adj != 0)[:, :, None]
    e = jnp.where(mask, e, -1e30)
    a = jax.nn.softmax(e, axis=1)
    a = jnp.where(mask, a, 0.0)
    out = jnp.einsum('ijh,jhd->ihd', a, z)
    return out.reshape(N, H * Dout)


def _reference_forward(params, adj, feats, *, negative_slope=0.2):
    h = feats
    layers = params["layers"]
    for (W, A) in layers[:-1]:
        h = jax.nn.elu(_reference_gatv2_conv(h, adj, W, A, negative_slope))
    W, A = layers[-1]
    out = _reference_gatv2_conv(h, adj, W, A, negative_slope)
    H_last, C = A.shape
    return out.reshape(feats.shape[0], H_last, C).mean(axis=1)


if __name__ == "__main__":
    N, in_dim, num_hidden, num_classes = 16, 8, 8, 4
    num_layers = 2
    heads = [2, 2, 1]
    negative_slope = 0.2

    key = jax.random.PRNGKey(0)
    kf, kp = jax.random.split(key)
    feats = jax.random.normal(kf, (N, in_dim), dtype=jnp.float32)

    # Deterministic small graph: self-loops + a directed ring so every node has
    # at least one incoming edge (zero-in-degree is undefined under softmax).
    adj = jnp.eye(N, dtype=jnp.float32)
    src = jnp.arange(N)
    dst = (src + 1) % N
    adj = adj.at[dst, src].set(1.0)  # edge src -> dst

    params = init_gatv2_params(kp, num_layers, in_dim, num_hidden, num_classes, heads)

    out = gatv2_forward(params, adj, feats, negative_slope=negative_slope)
    out = jax.block_until_ready(out)
    assert out.shape == (N, num_classes)
    assert bool(jnp.all(jnp.isfinite(out)))

    # loose tolerance: kernels use bf16 z / bf16 MXU operands, reference is f32
    ref = _reference_forward(params, adj, feats, negative_slope=negative_slope)
    max_err = float(jnp.max(jnp.abs(out - ref)))
    assert max_err < 0.1, f"max abs error vs reference: {max_err}"
    print("KERNEL_OK")
</pallas_src>

<mosaic_0001>
module attributes {stable_mosaic.version = 11 : i64} {
  func.func @_proj_kernel(%arg0: i32, %arg1: i32, %arg2: memref<16x8xbf16, #tpu.memory_space<vmem>>, %arg3: memref<8x16xbf16, #tpu.memory_space<vmem>>, %arg4: memref<16x16xbf16, #tpu.memory_space<vmem>>, %arg5: memref<16x16xbf16, #tpu.memory_space<vmem>>) attributes {dimension_semantics = [#tpu.dimension_semantics<parallel>, #tpu.dimension_semantics<parallel>], iteration_bounds = array<i64: 1, 1>, scalar_prefetch = 0 : i64, scratch_operands = 0 : i64, tpu.core_type = #tpu.core_type<tc>, window_params = [{transform_indices = @transform_0, window_bounds = array<i64: 16, 8>}, {transform_indices = @transform_1, window_bounds = array<i64: 8, 16>}, {transform_indices = @transform_2, window_bounds = array<i64: 16, 16>}, {transform_indices = @transform_3, window_bounds = array<i64: 16, 16>}]} {
    %c0 = arith.constant 0 : index
    %c0_0 = arith.constant 0 : index
    %0 = vector.load %arg2[%c0, %c0_0] : memref<16x8xbf16, #tpu.memory_space<vmem>>, vector<16x8xbf16>
    %c0_1 = arith.constant 0 : index
    %c0_2 = arith.constant 0 : index
    %1 = vector.load %arg3[%c0_1, %c0_2] : memref<8x16xbf16, #tpu.memory_space<vmem>>, vector<8x16xbf16>
    %cst = arith.constant dense<0.000000e+00> : vector<16x16xf32>
    %2 = tpu.matmul %0, %1, %cst {dimension_numbers = #tpu.dot_dimension_numbers<[1], [0], [0], [1], [0, 0, 1, 1], [], []>} : vector<16x8xbf16>, vector<8x16xbf16>, vector<16x16xf32> -> vector<16x16xf32>
    %3 = arith.truncf %2 : vector<16x16xf32> to vector<16x16xbf16>
    %c0_3 = arith.constant 0 : index
    %c0_4 = arith.constant 0 : index
    %4 = vector.load %arg4[%c0_3, %c0_4] : memref<16x16xbf16, #tpu.memory_space<vmem>>, vector<16x16xbf16>
    tpu.vector_store %arg4[%c0_3, %c0_4], %3 {strides = array<i32>} : memref<16x16xbf16, #tpu.memory_space<vmem>>, vector<16x16xbf16>,
    %5 = tpu.transpose %2, [1, 0] : vector<16x16xf32> -> vector<16x16xf32>
    %6 = arith.truncf %5 : vector<16x16xf32> to vector<16x16xbf16>
    %c0_5 = arith.constant 0 : index
    %c0_6 = arith.constant 0 : index
    %7 = vector.load %arg5[%c0_5, %c0_6] : memref<16x16xbf16, #tpu.memory_space<vmem>>, vector<16x16xbf16>
    tpu.vector_store %arg5[%c0_5, %c0_6], %6 {strides = array<i32>} : memref<16x16xbf16, #tpu.memory_space<vmem>>, vector<16x16xbf16>,
    return
  }
  func.func @transform_0(%arg0: i32, %arg1: i32) -> (i32, i32) {
    %c0_i32 = arith.constant 0 : i32
    %c0_i32_0 = arith.constant 0 : i32
    return %arg0, %c0_i32 : i32, i32
  }
  func.func @transform_1(%arg0: i32, %arg1: i32) -> (i32, i32) {
    %c0_i32 = arith.constant 0 : i32
    %c0_i32_0 = arith.constant 0 : i32
    return %c0_i32, %arg1 : i32, i32
  }
  func.func @transform_2(%arg0: i32, %arg1: i32) -> (i32, i32) {
    %c0_i32 = arith.constant 0 : i32
    return %arg0, %arg1 : i32, i32
  }
  func.func @transform_3(%arg0: i32, %arg1: i32) -> (i32, i32) {
    %c0_i32 = arith.constant 0 : i32
    return %arg1, %arg0 : i32, i32
  }
}

</mosaic_0001>

<llo_original>
// kernel: tpu_custom_call.1
$region0: #{tpu_custom_call.1}
  #allocation0 [shape = 'u32[]', space=smem, size = 0x4, offset = 0x4, fixed_abs, tag = 'smem constant byte address 0x4 - core index']
  #allocation1 [shape = 'u32[144,128]{1,0:T(1,128)}', space=vmem, size = 0x12000, scoped, tag = 'internal scratch']
  %s0 = inlined_call_operand.vmem [shape: bf16[16,8], index: 0, kind: input, shape index: {}]
  %s1 = inlined_call_operand.vmem [shape: bf16[8,16], index: 1, kind: input, shape index: {}]
  %s2 = inlined_call_operand.hbm [shape: bf16[16,16], index: 2, kind: output, shape index: {0}]
  %s3 = inlined_call_operand.hbm [shape: bf16[16,16], index: 3, kind: output, shape index: {1}]
  %4 = xla_tuple %s2, %s3
  %s5 = sld [smem:[#allocation0]]
  $region26: #{tpu_custom_call.1} parent=0
    _
  %s7 = ssub.s32 1, %s5
  %s8 = scalar_select 0, %s7, %s5
  $region1: #{tpu_custom_call.1} parent=0
    #allocation2 [shape = 'u8[4096]{0}', space=vmem, size = 0x1000, scoped, tag = 'output window, operand 0, single buffered']
    #allocation3 [shape = 's32[1]{0}', space=sflag, size = 0x4, scoped, tag = 'scoped memory for tpu_custom_call.1']
    #allocation4 [shape = 'u8[4096]{0}', space=vmem, size = 0x1000, scoped, tag = 'output window, operand 1, single buffered']
    #allocation5 [shape = 's32[1]{0}', space=sflag, size = 0x4, scoped, tag = 'scoped memory for tpu_custom_call.1']
    %9 = vsyncpa [#allocation3], 0
    %10 = vsyncpa [#allocation5], 0
    // Predicated region
    $region2: #{tpu_custom_call.1} parent=1 // pred_check
      _
    $region3: #{tpu_custom_call.1} parent=1 // pred_check_branch
      %12 = sbr.rel (0) target = $region5
    $region4: #{tpu_custom_call.1} parent=1 // pred_region
      _
    $region5: #{tpu_custom_call.1} parent=1 // pred_fallthru
      _
    // Predicated region
    $region6: #{tpu_custom_call.1} parent=1 // pred_check
      _
    $region7: #{tpu_custom_call.1} parent=1 // pred_check_branch
      %14 = sbr.rel (0) target = $region9
    $region8: #{tpu_custom_call.1} parent=1 // pred_region
      _
    $region9: #{tpu_custom_call.1} parent=1 // pred_fallthru
      _
    %v16 = vld [vmem:[%s0] sm:$0xf]
    %v17 = vld [vmem:[%s0 + $0x4] sm:$0xf]
    %v18 = vld [vmem:[%s1] sm:$0xf]
    %v21 = vunpack.c.l.b16 %v16
    %v22 = vunpack.c.l.b16 %v17
    %v23 = vpack.c.b16 %v22, %v21
    %vm24 = vcmask 64512
    %v26 = vsel %vm24, %v23, 0
    %vm28 = vcmask 1043456
    %v30 = vsel %vm28, %v18, 0
    %32 = vmatprep.subr.bf16.mxu0 0
    %33 = vmatpush1.bf16.msra.mxu0 %v30
    %34 = vmatprep.subr.bf16.mxu0 0
    %35 = vmatpush1.bf16.msra.mxu0 0
    %36 = vmatprep.subr.bf16.mxu0 0
    %37 = vmatpush1.bf16.msra.mxu0 0
    %38 = vmatprep.subr.bf16.mxu0 0
    %39 = vmatpush1.bf16.msra.mxu0 0
    %40 = vmatprep.subr.bf16.mxu0 0
    %41 = vmatpush1.bf16.msra.mxu0 0
    %42 = vmatprep.subr.bf16.mxu0 0
    %43 = vmatpush1.bf16.msra.mxu0 0
    %44 = vmatprep.subr.bf16.mxu0 0
    %45 = vmatpush1.bf16.msra.mxu0 0
    %46 = vmatprep.subr.bf16.mxu0 0
    %47 = vmatpush1.bf16.msra.mxu0 0
    %48 = vmatprep.subr.bf16.mxu0 0
    %49 = vmatpush1.bf16.msra.mxu0 0
    %50 = vmatprep.subr.bf16.mxu0 0
    %51 = vmatpush1.bf16.msra.mxu0 0
    %52 = vmatprep.subr.bf16.mxu0 0
    %53 = vmatpush1.bf16.msra.mxu0 0
    %54 = vmatprep.subr.bf16.mxu0 0
    %55 = vmatpush1.bf16.msra.mxu0 0
    %56 = vmatprep.subr.bf16.mxu0 0
    %57 = vmatpush1.bf16.msra.mxu0 0
    %58 = vmatprep.subr.bf16.mxu0 0
    %59 = vmatpush1.bf16.msra.mxu0 0
    %60 = vmatprep.subr.bf16.mxu0 0
    %61 = vmatpush1.bf16.msra.mxu0 0
    %62 = vmatprep.subr.bf16.mxu0 0
    %63 = vmatpush1.bf16.msra.mxu0 0
    %64 = vmatprep.mubr.bf16.mxu0 0
    %65 = vmatmul.mubr.bf16.gmra.mrb[0].mxu0 %v26
    %v66 = vpop.f32.mrb[0].mxu0
    %v67 = vadd.f32 0.0, %v66
    %v68 = vpop.f32.mrb[0].mxu0
    %v69 = vpop.f32.mrb[0].mxu0
    %v70 = vadd.f32 0.0, %v69
    %v71 = vpop.f32.mrb[0].mxu0
    %72 = vdwg.mxu0
    %v73 = vpack.c.bf16 %v70, %v67
    %v75 = vunpack.c.l.b16 %v73
    %v76 = vunpack.c.h.b16 %v73
    %v77 = vpack.c.b16 %v75, %v75
    %v78 = vpack.c.b16 %v76, %v76
    %vm81 = vcmask 125952
    %82 = vst.msk [vmem:[#allocation2] sm:$0xf] %vm81, %v77
    %83 = vst.msk [vmem:[#allocation2 + $0x4] sm:$0xf] %vm81, %v78
    %84 = vxpose.xlu0.b32.start [1/16] %v67, 128
    %85 = vxpose.xlu0.b32.cont [2/16] %v70, 128
    %86 = vxpose.xlu0.b32.cont [3/16] 0.0, 128
    %87 = vxpose.xlu0.b32.cont [4/16] 0.0, 128
    %88 = vxpose.xlu0.b32.cont [5/16] 0.0, 128
    %89 = vxpose.xlu0.b32.cont [6/16] 0.0, 128
    %90 = vxpose.xlu0.b32.cont [7/16] 0.0, 128
    %91 = vxpose.xlu0.b32.cont [8/16] 0.0, 128
    %92 = vxpose.xlu0.b32.cont [9/16] 0.0, 128
    %93 = vxpose.xlu0.b32.cont [10/16] 0.0, 128
    %94 = vxpose.xlu0.b32.cont [11/16] 0.0, 128
    %95 = vxpose.xlu0.b32.cont [12/16] 0.0, 128
    %96 = vxpose.xlu0.b32.cont [13/16] 0.0, 128
    %97 = vxpose.xlu0.b32.cont [14/16] 0.0, 128
    %98 = vxpose.xlu0.b32.cont [15/16] 0.0, 128
    %99 = vxpose.xlu0.b32.end [16/16] 0.0, 128
    %v100 = vpop.trf.xlu0
    %v101 = vpop.trf.xlu0
    %v102 = vpop.trf.xlu0
    %v103 = vpop.trf.xlu0
    %v104 = vpop.trf.xlu0
    %v105 = vpop.trf.xlu0
    %v106 = vpop.trf.xlu0
    %v107 = vpop.trf.xlu0
    %v108 = vpop.trf.xlu0
    %v109 = vpop.trf.xlu0
    %v110 = vpop.trf.xlu0
    %v111 = vpop.trf.xlu0
    %v112 = vpop.trf.xlu0
    %v113 = vpop.trf.xlu0
    %v114 = vpop.trf.xlu0
    %v115 = vpop.trf.xlu0
    %v116 = vpack.c.bf16 %v101, %v100
    %v118 = vunpack.c.l.b16 %v116
    %v119 = vunpack.c.h.b16 %v116
    %v120 = vpack.c.b16 %v118, %v118
    %v121 = vpack.c.b16 %v119, %v119
    %124 = vst.msk [vmem:[#allocation4] sm:$0xf] %vm81, %v120
    %125 = vst.msk [vmem:[#allocation4 + $0x4] sm:$0xf] %vm81, %v121
    // Predicated region
    $region10: #{tpu_custom_call.1} parent=1 // pred_check
      _
    $region11: #{tpu_custom_call.1} parent=1 // pred_check_branch
      %127 = sbr.rel (0) target = $region13
    $region12: #{tpu_custom_call.1} parent=1 // pred_region
      %s129 = ssub.s32 128, 128
      %130 = vsyncadd [#allocation3], %s129
      %s131 = sshll.u32 [#allocation2], 4
      %s132 = int_to_ptr.vmem [resolvable:$true] %s131
      %137 = dma.vmem_to_hbm [thread:$0]  %s132, 128, %s2, [#allocation3], 64, 64, 4
    $region13: #{tpu_custom_call.1} parent=1 // pred_fallthru
      _
    // Predicated region
    $region14: #{tpu_custom_call.1} parent=1 // pred_check
      _
    $region15: #{tpu_custom_call.1} parent=1 // pred_check_branch
      %139 = sbr.rel (0) target = $region17
    $region16: #{tpu_custom_call.1} parent=1 // pred_region
      %s141 = ssub.s32 128, 128
      %142 = vsyncadd [#allocation5], %s141
      %s143 = sshll.u32 [#allocation4], 4
      %s144 = int_to_ptr.vmem [resolvable:$true] %s143
      %149 = dma.vmem_to_hbm [thread:$0]  %s144, 128, %s3, [#allocation5], 64, 64, 4
    $region17: #{tpu_custom_call.1} parent=1 // pred_fallthru
      _
    // Predicated region
    $region18: #{tpu_custom_call.1} parent=1 // pred_check
      _
    $region19: #{tpu_custom_call.1} parent=1 // pred_check_branch
      %151 = sbr.rel (0) target = $region21
    $region20: #{tpu_custom_call.1} parent=1 // pred_region
      %152 = dma.done [#allocation3], 128
    $region21: #{tpu_custom_call.1} parent=1 // pred_fallthru
      _
    // Predicated region
    $region22: #{tpu_custom_call.1} parent=1 // pred_check
      _
    $region23: #{tpu_custom_call.1} parent=1 // pred_check_branch
      %154 = sbr.rel (0) target = $region25
    $region24: #{tpu_custom_call.1} parent=1 // pred_region
      %155 = dma.done [#allocation5], 128
    $region25: #{tpu_custom_call.1} parent=1 // pred_fallthru
      _
    %156 = vsyncpa [#allocation3], 1
    %157 = vsyncpa [#allocation5], 1

</llo_original>
